<compile_context>
chip_gen: v7x
topology: tpu7x:2x2x1
jax: 0.10.0
libtpu: 0.0.40
codegen_flags: <defaults>
</compile_context>

<pallas_src>
import jax
import jax.numpy as jnp
from jax.experimental import pallas as pl
from jax.experimental.pallas import tpu as pltpu


def _denoise_kernel(coef_ref, a_ref, x_ref, z_ref, out_ref):
    """One (N*C, T) spatial tile of the fused noise-pred + DDPM update.

    coef_ref : (2,)      f32 SMEM   [coef_input, coef_z]
    a_ref    : (NC, NC)  f32 VMEM   kron(I_N, coef_eps * W)   (1x1-conv mix)
    x_ref    : (NC, T)        VMEM
    z_ref    : (NC, T)        VMEM
    out_ref  : (NC, T)        VMEM
    """
    ci = coef_ref[0]
    cz = coef_ref[1]

    x = x_ref[...].astype(jnp.float32)      # no-op for f32 inputs
    z = z_ref[...].astype(jnp.float32)

    # Channel mix (pre-scaled by coef_eps) on the otherwise-idle MXU,
    # accumulated in f32. The DDPM update is then a single FMA per element.
    mix = jnp.dot(a_ref[...], x, preferred_element_type=jnp.float32)
    out_ref[...] = (mix + ci * x + cz * z).astype(out_ref.dtype)


def _pick_spatial_tile(HW, NC, itemsize,
                       vmem_budget_bytes=24 << 20, target_lanes=16384):
    """Largest lane-dense spatial tile T that divides HW and fits VMEM.

    Budget covers double-buffered x / z / out blocks of shape (NC_padded, T)
    plus the f32 compute temporaries; conservative for v5e/v6e/v7x defaults.
    """
    rows = pl.cdiv(NC, 8) * 8                       # sublane-padded rows
    # 2 pipeline buffers x 3 streamed arrays + ~3 f32 full-tile temporaries
    bytes_per_lane = rows * (2 * 3 * itemsize + 3 * 4)
    cap = max(128, min(target_lanes, vmem_budget_bytes // bytes_per_lane))
    T = HW
    while T > cap and T % 256 == 0:
        T //= 2
    # Prefer >=2 grid tiles so both v7x TensorCores get work.
    if HW // T < 2 and T % 256 == 0:
        T //= 2
    return T


def denoising_step(x, z, w, coefs):
    """DDPM reverse step: x_prev = ci*x + ce*(1x1-conv_W(x)) + cz*z.

    x, z  : (N, C, H, W)
    w     : (C, C) float32   1x1-conv noise-predictor weight
    coefs : (3,)   float32   [coef_input, coef_eps, coef_z]  (runtime scalars)
    """
    N, C, H, W = x.shape
    NC, HW = N * C, H * W

    coefs = jnp.asarray(coefs, jnp.float32).reshape(3)
    ci, ce, cz = coefs[0], coefs[1], coefs[2]

    # Fold coef_eps into the 1x1-conv weight and block-diagonalize over batch
    # so the whole (N*C, T) tile is mixed by a single small matmul. These are
    # runtime arrays (traced scalars OK) → no recompilation per timestep.
    M = ce * jnp.asarray(w, jnp.float32)              # (C, C)
    A = jnp.kron(jnp.eye(N, dtype=jnp.float32), M)    # (NC, NC)

    xf = x.reshape(NC, HW)
    zf = z.reshape(NC, HW)

    # Lane-dense blocks: pad the spatial axis to a multiple of 128 if needed.
    HW_pad = pl.cdiv(HW, 128) * 128
    if HW_pad != HW:
        xf = jnp.pad(xf, ((0, 0), (0, HW_pad - HW)))
        zf = jnp.pad(zf, ((0, 0), (0, HW_pad - HW)))

    T = _pick_spatial_tile(HW_pad, NC, x.dtype.itemsize)
    n_tiles = HW_pad // T

    # NOTE: if the sampling loop overwrites x each step, the output could be
    # aliased onto x via input_output_aliases={2: 0} to save one HBM buffer.
    out = pl.pallas_call(
        _denoise_kernel,
        out_shape=jax.ShapeDtypeStruct((NC, HW_pad), x.dtype),
        grid_spec=pltpu.PrefetchScalarGridSpec(
            num_scalar_prefetch=0,
            grid=(n_tiles,),
            in_specs=[
                pl.BlockSpec(memory_space=pltpu.MemorySpace.SMEM),  # [ci, cz]
                pl.BlockSpec((NC, NC), lambda t: (0, 0)),           # A (tiny)
                pl.BlockSpec((NC, T), lambda t: (0, t)),            # x tile
                pl.BlockSpec((NC, T), lambda t: (0, t)),            # z tile
            ],
            out_specs=pl.BlockSpec((NC, T), lambda t: (0, t)),
        ),
        compiler_params=pltpu.CompilerParams(
            dimension_semantics=("parallel",),
            vmem_limit_bytes=48 << 20,   # < v7x's 64 MiB physical VMEM
        ),
    )(jnp.stack([ci, cz]), A, xf, zf)

    if HW_pad != HW:
        out = out[:, :HW]
    return out.reshape(N, C, H, W)


def reference(x, z, w, coefs):
    # Exact f32 elementwise reference (no matmul → no precision ambiguity).
    ci, ce, cz = coefs[0], coefs[1], coefs[2]
    pred_eps = jnp.sum(w[None, :, :, None, None] * x[:, None, :, :, :], axis=2)
    return ci * x + ce * pred_eps + cz * z


if __name__ == "__main__":
    # small shapes consistent with the module: batch=2, channels=4, spatial=16
    N, C, H, W = 2, 4, 16, 16

    key = jax.random.PRNGKey(0)
    kx, kz, kw = jax.random.split(key, 3)
    x = jax.random.normal(kx, (N, C, H, W), dtype=jnp.float32)
    z = jax.random.normal(kz, (N, C, H, W), dtype=jnp.float32)
    # deterministic noise-predictor weight (1x1 conv, C -> C)
    w = 0.1 * jax.random.normal(kw, (C, C), dtype=jnp.float32)

    # diffusion-schedule scalars (registered buffers in the PyTorch module),
    # kept as traced JAX scalars to mimic a jitted sampling loop.
    alpha = jnp.float32(0.98)
    alpha_bar_prev = jnp.float32(0.95)
    alpha_bar = alpha_bar_prev * alpha
    coef_z = jnp.sqrt(1.0 - alpha)                      # large_entropy=True
    coef_input = jnp.sqrt(1.0 / alpha)
    coef_eps = -(1.0 - alpha) / jnp.sqrt(alpha * (1.0 - alpha_bar))
    coefs = jnp.stack([coef_input, coef_eps, coef_z])

    out = denoising_step(x, z, w, coefs)
    out = jax.block_until_ready(out)

    ref = reference(x, z, w, coefs)
    assert out.shape == (N, C, H, W)
    # The small ce*(W@x) term runs through the MXU; tolerance covers possible
    # reduced-precision contraction passes (observed error is ~1e-6 with full
    # f32 contraction).
    assert jnp.allclose(out, ref, atol=2e-3, rtol=1e-3), "mismatch vs reference"

    print("KERNEL_OK")
</pallas_src>

<mosaic_0001>
module attributes {stable_mosaic.version = 11 : i64} {
  func.func @_denoise_kernel(%arg0: i32, %arg1: memref<2xf32, #tpu.memory_space<smem>>, %arg2: memref<8x8xf32, #tpu.memory_space<vmem>>, %arg3: memref<8x128xf32, #tpu.memory_space<vmem>>, %arg4: memref<8x128xf32, #tpu.memory_space<vmem>>, %arg5: memref<8x128xf32, #tpu.memory_space<vmem>>) attributes {dimension_semantics = [#tpu.dimension_semantics<parallel>], iteration_bounds = array<i64: 2>, scalar_prefetch = 0 : i64, scratch_operands = 0 : i64, tpu.core_type = #tpu.core_type<tc>, window_params = [{transform_indices = @transform_0, window_bounds = array<i64: 2>}, {pipeline_mode = #tpu.pipeline_mode<synchronous>, transform_indices = @transform_1, window_bounds = array<i64: 8, 8>}, {transform_indices = @transform_2, window_bounds = array<i64: 8, 128>}, {transform_indices = @transform_3, window_bounds = array<i64: 8, 128>}, {transform_indices = @transform_4, window_bounds = array<i64: 8, 128>}]} {
    %c0 = arith.constant 0 : index
    %0 = memref.load %arg1[%c0] : memref<2xf32, #tpu.memory_space<smem>>
    %c1 = arith.constant 1 : index
    %1 = memref.load %arg1[%c1] : memref<2xf32, #tpu.memory_space<smem>>
    %c0_0 = arith.constant 0 : index
    %c0_1 = arith.constant 0 : index
    %2 = vector.load %arg3[%c0_0, %c0_1] : memref<8x128xf32, #tpu.memory_space<vmem>>, vector<8x128xf32>
    %c0_2 = arith.constant 0 : index
    %c0_3 = arith.constant 0 : index
    %3 = vector.load %arg4[%c0_2, %c0_3] : memref<8x128xf32, #tpu.memory_space<vmem>>, vector<8x128xf32>
    %c0_4 = arith.constant 0 : index
    %c0_5 = arith.constant 0 : index
    %4 = vector.load %arg2[%c0_4, %c0_5] : memref<8x8xf32, #tpu.memory_space<vmem>>, vector<8x8xf32>
    %cst = arith.constant dense<0.000000e+00> : vector<8x128xf32>
    %5 = tpu.matmul %4, %2, %cst {dimension_numbers = #tpu.dot_dimension_numbers<[1], [0], [0], [1], [0, 0, 1, 1], [], []>} : vector<8x8xf32>, vector<8x128xf32>, vector<8x128xf32> -> vector<8x128xf32>
    %6 = vector.broadcast %0 : f32 to vector<8x128xf32>
    %7 = arith.mulf %6, %2 : vector<8x128xf32>
    %8 = arith.addf %5, %7 : vector<8x128xf32>
    %9 = vector.broadcast %1 : f32 to vector<8x128xf32>
    %10 = arith.mulf %9, %3 : vector<8x128xf32>
    %11 = arith.addf %8, %10 : vector<8x128xf32>
    %c0_6 = arith.constant 0 : index
    %c0_7 = arith.constant 0 : index
    %12 = vector.load %arg5[%c0_6, %c0_7] : memref<8x128xf32, #tpu.memory_space<vmem>>, vector<8x128xf32>
    tpu.vector_store %arg5[%c0_6, %c0_7], %11 {strides = array<i32>} : memref<8x128xf32, #tpu.memory_space<vmem>>, vector<8x128xf32>,
    return
  }
  func.func @transform_0(%arg0: i32) -> i32 {
    %c0_i32 = arith.constant 0 : i32
    %c0_i32_0 = arith.constant 0 : i32
    return %c0_i32 : i32
  }
  func.func @transform_1(%arg0: i32) -> (i32, i32) {
    %c0_i32 = arith.constant 0 : i32
    %c0_i32_0 = arith.constant 0 : i32
    %c0_i32_1 = arith.constant 0 : i32
    return %c0_i32, %c0_i32_0 : i32, i32
  }
  func.func @transform_2(%arg0: i32) -> (i32, i32) {
    %c0_i32 = arith.constant 0 : i32
    %c0_i32_0 = arith.constant 0 : i32
    return %c0_i32, %arg0 : i32, i32
  }
  func.func @transform_3(%arg0: i32) -> (i32, i32) {
    %c0_i32 = arith.constant 0 : i32
    %c0_i32_0 = arith.constant 0 : i32
    return %c0_i32, %arg0 : i32, i32
  }
  func.func @transform_4(%arg0: i32) -> (i32, i32) {
    %c0_i32 = arith.constant 0 : i32
    %c0_i32_0 = arith.constant 0 : i32
    return %c0_i32, %arg0 : i32, i32
  }
}

</mosaic_0001>

<llo_original>
// kernel: tpu_custom_call.1
$region0: #{tpu_custom_call.1}
  #allocation0 [shape = 'u32[]', space=smem, size = 0x4, offset = 0x4, fixed_abs, tag = 'smem constant byte address 0x4 - core index']
  #allocation1 [shape = 'u32[144,128]{1,0:T(1,128)}', space=vmem, size = 0x12000, scoped, tag = 'internal scratch']
  %s0 = inlined_call_operand.hbm [shape: f32[2], index: 0, kind: input, shape index: {}]
  %s1 = inlined_call_operand.hbm [shape: f32[8,8], index: 1, kind: input, shape index: {}]
  %s2 = inlined_call_operand.hbm [shape: f32[8,256], index: 2, kind: input, shape index: {}]
  %s3 = inlined_call_operand.hbm [shape: f32[8,256], index: 3, kind: input, shape index: {}]
  %s4 = inlined_call_operand.hbm [shape: f32[8,256], index: 4, kind: output, shape index: {}]
  %s5 = sld [smem:[#allocation0]]
  $region65: #{tpu_custom_call.1} parent=0
    _
  %s7 = ssub.s32 1, %s5
  %s8 = scalar_select 0, %s7, %s5
  $region1: #{tpu_custom_call.1} parent=0
    #allocation2 [shape = 'u8[512]{0}', space=smem, size = 0x200, scoped, tag = 'input window, operand 0, single buffered']
    #allocation3 [shape = 's32[2]{0}', space=sflag, size = 0x8, scoped, tag = 'scoped memory for tpu_custom_call.1']
    #allocation4 [shape = 's32[2]{0}', space=sflag, size = 0x8, scoped, tag = 'scoped memory for tpu_custom_call.1']
    #allocation5 [shape = 's32[2]{0}', space=sflag, size = 0x8, scoped, tag = 'scoped memory for tpu_custom_call.1']
    #allocation6 [shape = 'u8[4096]{0}', space=vmem, size = 0x1000, scoped, tag = 'input window, operand 1, single buffered']
    #allocation7 [shape = 'u8[8192]{0}', space=vmem, size = 0x2000, scoped, tag = 'input window, operand 2']
    #allocation8 [shape = 's32[2]{0}', space=sflag, size = 0x8, scoped, tag = 'scoped memory for tpu_custom_call.1']
    #allocation9 [shape = 'u8[8192]{0}', space=vmem, size = 0x2000, scoped, tag = 'input window, operand 3']
    #allocation10 [shape = 'u8[8192]{0}', space=vmem, size = 0x2000, scoped, tag = 'output window, operand 0']
    %9 = vsyncpa [#allocation5], 0
    %10 = vsyncpa [#allocation3], 0
    %11 = vsyncpa [#allocation8], 0
    %s12 = scalar_lea.sflag [#allocation8], 1
    %13 = vsyncpa %s12, 0
    %14 = vsyncpa [#allocation4], 0
    %s15 = scalar_lea.sflag [#allocation4], 1
    %16 = vsyncpa %s15, 0
    loop: start=0, step=1, limit=4
    $region2: #{tpu_custom_call.1} parent=1 // loop_pre_header
      _
    $region3: #{tpu_custom_call.1} parent=1 // loop_header
      %s18 = sphi 0, %s22
      %p19 = scmp.ge.s32.totalorder %s18, 4
      %s26 = sphi 0, %s26
      %s28 = sphi 0, %s26
      %s29 = sphi 0, %s28
      %s43 = sphi 0, %s29
      %s47 = sphi 0, %s47
      %s49 = sphi 0, %s47
      %s50 = sphi 0, %s49
      %s64 = sphi 0, %s50
      %s70 = sphi 0, %s72
      %s73 = sphi 0, %s70
      %s74 = sphi 0, %s73
      %s90 = sphi 0, %s74
      %s96 = sphi 0, %s98
      %s99 = sphi 0, %s96
      %s100 = sphi 0, %s99
      %s116 = sphi 0, %s100
      %s122 = sphi 0, %s124
      %s125 = sphi 0, %s122
      %s126 = sphi 0, %s125
      %s142 = sphi 0, %s126
    $region4: #{tpu_custom_call.1} parent=1 // loop_header_branch
      %21 = sbr.rel (%p19) target = $region8
    $region5: #{tpu_custom_call.1} parent=1 // loop_body
      %s23 = ssub.s32 %s18, 1
      %s24 = ssub.s32 %s18, 2
      %s25 = sadd.s32 %s18, 1
      %s27 = sadd.s32 %s26, 1
      %p30 = scmp.eq.s32.totalorder %s18, 1
      %p31 = scmp.ne.s32.totalorder %s26, %s28
      %p32 = scmp.eq.s32.totalorder %s18, 0
      %p33 = por %p31, %p32
      %p34 = scmp.ne.s32.totalorder %s26, %s28
      %p35 = scmp.eq.s32.totalorder %s23, 1
      %p36 = por %p34, %p35
      %p37 = scmp.ne.s32.totalorder %s28, %s29
      %p38 = scmp.eq.s32.totalorder %s23, 0
      %p39 = por %p37, %p38
      %p40 = scmp.ne.s32.totalorder %s28, %s29
      %p41 = scmp.eq.s32.totalorder %s24, 1
      %p42 = por %p40, %p41
      %p44 = scmp.ne.s32.totalorder %s29, %s43
      %p45 = scmp.eq.s32.totalorder %s24, 0
      %p46 = por %p44, %p45
      %s48 = sadd.s32 %s47, 1
      %p51 = scmp.eq.s32.totalorder %s18, 1
      %p52 = scmp.ne.s32.totalorder %s47, %s49
      %p53 = scmp.eq.s32.totalorder %s18, 0
      %p54 = por %p52, %p53
      %p55 = scmp.ne.s32.totalorder %s47, %s49
      %p56 = scmp.eq.s32.totalorder %s23, 1
      %p57 = por %p55, %p56
      %p58 = scmp.ne.s32.totalorder %s49, %s50
      %p59 = scmp.eq.s32.totalorder %s23, 0
      %p60 = por %p58, %p59
      %p61 = scmp.ne.s32.totalorder %s49, %s50
      %p62 = scmp.eq.s32.totalorder %s24, 1
      %p63 = por %p61, %p62
      %p65 = scmp.ne.s32.totalorder %s50, %s64
      %p66 = scmp.eq.s32.totalorder %s24, 0
      %p67 = por %p65, %p66
      %s68 = ssub.s32 %s18, %s25
      %p69 = scmp.eq.s32.totalorder %s68, 0
      %s71 = sadd.s32 %s70, 1
      %s72 = scalar_select %p69, %s70, %s71
      %p75 = pneg %p69
      %p76 = scmp.eq.s32.totalorder %s18, 1
      %p77 = por %p75, %p76
      %p78 = scmp.ne.s32.totalorder %s70, %s73
      %p79 = scmp.eq.s32.totalorder %s18, 0
      %p80 = por %p78, %p79
      %p81 = scmp.ne.s32.totalorder %s70, %s73
      %p82 = scmp.eq.s32.totalorder %s23, 1
      %p83 = por %p81, %p82
      %p84 = scmp.ne.s32.totalorder %s73, %s74
      %p85 = scmp.eq.s32.totalorder %s23, 0
      %p86 = por %p84, %p85
      %p87 = scmp.ne.s32.totalorder %s73, %s74
      %p88 = scmp.eq.s32.totalorder %s24, 1
      %p89 = por %p87, %p88
      %p91 = scmp.ne.s32.totalorder %s74, %s90
      %p92 = scmp.eq.s32.totalorder %s24, 0
      %p93 = por %p91, %p92
      %s94 = ssub.s32 %s18, %s25
      %p95 = scmp.eq.s32.totalorder %s94, 0
      %s97 = sadd.s32 %s96, 1
      %s98 = scalar_select %p95, %s96, %s97
      %p101 = pneg %p95
      %p102 = scmp.eq.s32.totalorder %s18, 1
      %p103 = por %p101, %p102
      %p104 = scmp.ne.s32.totalorder %s96, %s99
      %p105 = scmp.eq.s32.totalorder %s18, 0
      %p106 = por %p104, %p105
      %p107 = scmp.ne.s32.totalorder %s96, %s99
      %p108 = scmp.eq.s32.totalorder %s23, 1
      %p109 = por %p107, %p108
      %p110 = scmp.ne.s32.totalorder %s99, %s100
      %p111 = scmp.eq.s32.totalorder %s23, 0
      %p112 = por %p110, %p111
      %p113 = scmp.ne.s32.totalorder %s99, %s100
      %p114 = scmp.eq.s32.totalorder %s24, 1
      %p115 = por %p113, %p114
      %p117 = scmp.ne.s32.totalorder %s100, %s116
      %p118 = scmp.eq.s32.totalorder %s24, 0
      %p119 = por %p117, %p118
      %s120 = ssub.s32 %s18, %s25
      %p121 = scmp.eq.s32.totalorder %s120, 0
      %s123 = sadd.s32 %s122, 1
      %s124 = scalar_select %p121, %s122, %s123
      %p127 = pneg %p121
      %p128 = scmp.eq.s32.totalorder %s18, 1
      %p129 = por %p127, %p128
      %p130 = scmp.ne.s32.totalorder %s122, %s125
      %p131 = scmp.eq.s32.totalorder %s18, 0
      %p132 = por %p130, %p131
      %p133 = scmp.ne.s32.totalorder %s122, %s125
      %p134 = scmp.eq.s32.totalorder %s23, 1
      %p135 = por %p133, %p134
      %p136 = scmp.ne.s32.totalorder %s125, %s126
      %p137 = scmp.eq.s32.totalorder %s23, 0
      %p138 = por %p136, %p137
      %p139 = scmp.ne.s32.totalorder %s125, %s126
      %p140 = scmp.eq.s32.totalorder %s24, 1
      %p141 = por %p139, %p140
      %p143 = scmp.ne.s32.totalorder %s126, %s142
      %p144 = scmp.eq.s32.totalorder %s24, 0
      %p145 = por %p143, %p144
      %p146 = scmp.le.s32.totalorder 1, %s18
      %p147 = scmp.lt.s32.totalorder %s18, 3
      %p148 = pnand %p146, %p147
      %p149 = pneg %p148
      // Predicated region
      $region9: #{tpu_custom_call.1} parent=5 // pred_check
        _
      $region10: #{tpu_custom_call.1} parent=5 // pred_check_branch
        %151 = sbr.rel (%p148) target = $region12
      $region11: #{tpu_custom_call.1} parent=5 // pred_region
        %s152 = ssub.s32 %s18, 1
        // Predicated region
        $region13: #{tpu_custom_call.1} parent=11 // pred_check
          %p153 = pneg %p39
        $region14: #{tpu_custom_call.1} parent=11 // pred_check_branch
          %155 = sbr.rel (%p153) target = $region16
        $region15: #{tpu_custom_call.1} parent=11 // pred_region
          %s157 = ssub.s32 16, 16
          %158 = vsyncadd [#allocation5], %s157
          %161 = dma.hbm_to_smem %s0, 16, [#allocation2], [#allocation5]
        $region16: #{tpu_custom_call.1} parent=11 // pred_fallthru
          _
        // Predicated region
        $region17: #{tpu_custom_call.1} parent=11 // pred_check
          %p162 = pneg %p60
        $region18: #{tpu_custom_call.1} parent=11 // pred_check_branch
          %164 = sbr.rel (%p162) target = $region20
        $region19: #{tpu_custom_call.1} parent=11 // pred_region
          %s166 = ssub.s32 128, 128
          %167 = vsyncadd [#allocation3], %s166
          %s169 = sshll.u32 [#allocation6], 4
          %s170 = int_to_ptr.vmem [resolvable:$true] %s169
          %172 = dma.hbm_to_vmem [thread:$0]  %s1, 128, %s170, [#allocation3]
        $region20: #{tpu_custom_call.1} parent=11 // pred_fallthru
          _
      $region12: #{tpu_custom_call.1} parent=5 // pred_fallthru
        _
      %p173 = scmp.lt.s32.totalorder %s18, 2
      // Predicated region
      $region21: #{tpu_custom_call.1} parent=5 // pred_check
        %p174 = pneg %p173
      $region22: #{tpu_custom_call.1} parent=5 // pred_check_branch
        %176 = sbr.rel (%p174) target = $region24
      $region23: #{tpu_custom_call.1} parent=5 // pred_region
        // Predicated region
        $region25: #{tpu_custom_call.1} parent=23 // pred_check
          %p177 = pneg %p80
        $region26: #{tpu_custom_call.1} parent=23 // pred_check_branch
          %179 = sbr.rel (%p177) target = $region28
        $region27: #{tpu_custom_call.1} parent=23 // pred_region
          %s180 = sand.u32 %s18, 1
          %s181 = scalar_lea.sflag [#allocation8], %s180
          %s182 = sand.u32 %s70, 1
          %s183 = smul.addr %s182, 8
          %s184 = scalar_lea.vmem [#allocation7], %s183
          %s186 = ssub.s32 128, 128
          %187 = vsyncadd %s181, %s186
          %s188 = smul.addr %s18, 128
          %s189 = scalar_lea.hbm %s2, %s188
          %s191 = sshll.u32 %s184, 4
          %s192 = int_to_ptr.vmem [resolvable:$true] %s191
          %194 = dma.hbm_to_vmem [thread:$0]  %s189, 128, %s192, %s181
        $region28: #{tpu_custom_call.1} parent=23 // pred_fallthru
          _
        // Predicated region
        $region29: #{tpu_custom_call.1} parent=23 // pred_check
          %p195 = pneg %p106
        $region30: #{tpu_custom_call.1} parent=23 // pred_check_branch
          %197 = sbr.rel (%p195) target = $region32
        $region31: #{tpu_custom_call.1} parent=23 // pred_region
          %s198 = sand.u32 %s18, 1
          %s199 = scalar_lea.sflag [#allocation8], %s198
          %s200 = sand.u32 %s96, 1
          %s201 = smul.addr %s200, 8
          %s202 = scalar_lea.vmem [#allocation9], %s201
          %s204 = ssub.s32 128, 128
          %205 = vsyncadd %s199, %s204
          %s206 = smul.addr %s18, 128
          %s207 = scalar_lea.hbm %s3, %s206
          %s209 = sshll.u32 %s202, 4
          %s210 = int_to_ptr.vmem [resolvable:$true] %s209
          %212 = dma.hbm_to_vmem [thread:$0]  %s207, 128, %s210, %s199
        $region32: #{tpu_custom_call.1} parent=23 // pred_fallthru
          _
      $region24: #{tpu_custom_call.1} parent=5 // pred_fallthru
        _
      %p213 = scmp.le.s32.totalorder 1, %s18
      %p214 = scmp.lt.s32.totalorder %s18, 3
      %p215 = pnand %p213, %p214
      %p216 = pneg %p215
      // Predicated region
      $region33: #{tpu_custom_call.1} parent=5 // pred_check
        _
      $region34: #{tpu_custom_call.1} parent=5 // pred_check_branch
        %218 = sbr.rel (%p215) target = $region36
      $region35: #{tpu_custom_call.1} parent=5 // pred_region
        %s219 = ssub.s32 %s18, 1
        // Predicated region
        $region37: #{tpu_custom_call.1} parent=35 // pred_check
          %p220 = pneg %p39
        $region38: #{tpu_custom_call.1} parent=35 // pred_check_branch
          %222 = sbr.rel (%p220) target = $region40
        $region39: #{tpu_custom_call.1} parent=35 // pred_region
          %223 = dma.done [#allocation5], 16
        $region40: #{tpu_custom_call.1} parent=35 // pred_fallthru
          _
        // Predicated region
        $region41: #{tpu_custom_call.1} parent=35 // pred_check
          %p224 = pneg %p60
        $region42: #{tpu_custom_call.1} parent=35 // pred_check_branch
          %226 = sbr.rel (%p224) target = $region44
        $region43: #{tpu_custom_call.1} parent=35 // pred_region
          %227 = dma.done [#allocation3], 128
        $region44: #{tpu_custom_call.1} parent=35 // pred_fallthru
          _
        %s228 = sand.u32 %s23, 1
        %s229 = scalar_lea.sflag [#allocation8], %s228
        %s230 = sand.u32 %s73, 1
        %s231 = smul.addr %s230, 8
        %s232 = scalar_lea.vmem [#allocation7], %s231
        // Predicated region
        $region45: #{tpu_custom_call.1} parent=35 // pred_check
          %p233 = pneg %p86
        $region46: #{tpu_custom_call.1} parent=35 // pred_check_branch
          %235 = sbr.rel (%p233) target = $region48
        $region47: #{tpu_custom_call.1} parent=35 // pred_region
          %236 = dma.done %s229, 128
        $region48: #{tpu_custom_call.1} parent=35 // pred_fallthru
          _
        %s237 = sand.u32 %s23, 1
        %s238 = scalar_lea.sflag [#allocation8], %s237
        %s239 = sand.u32 %s99, 1
        %s240 = smul.addr %s239, 8
        %s241 = scalar_lea.vmem [#allocation9], %s240
        // Predicated region
        $region49: #{tpu_custom_call.1} parent=35 // pred_check
          %p242 = pneg %p112
        $region50: #{tpu_custom_call.1} parent=35 // pred_check_branch
          %244 = sbr.rel (%p242) target = $region52
        $region51: #{tpu_custom_call.1} parent=35 // pred_region
          %245 = dma.done %s238, 128
        $region52: #{tpu_custom_call.1} parent=35 // pred_fallthru
          _
        %246 = sfence
        %p247 = pneg %p39
        %p248 = pneg %p36
        %p249 = pneg %p60
        %p250 = pneg %p57
        %s251 = sand.u32 %s23, 1
        %s252 = scalar_lea.sflag [#allocation8], %s251
        %s253 = sand.u32 %s73, 1
        %s254 = smul.addr %s253, 8
        %s255 = scalar_lea.vmem [#allocation7], %s254
        %p256 = pneg %p86
        %p257 = pneg %p83
        %s258 = sand.u32 %s23, 1
        %s259 = scalar_lea.sflag [#allocation8], %s258
        %s260 = sand.u32 %s99, 1
        %s261 = smul.addr %s260, 8
        %s262 = scalar_lea.vmem [#allocation9], %s261
        %p263 = pneg %p112
        %p264 = pneg %p109
        %p265 = pneg %p138
        %p266 = pneg %p135
        %s267 = sand.u32 %s125, 1
        %s268 = scalar_lea.sflag [#allocation4], %s267
        %s269 = sand.u32 %s125, 1
        %s270 = smul.addr %s269, 8
        %s271 = scalar_lea.vmem [#allocation10], %s270
        %s272 = sld [smem:[#allocation2]]
        %s273 = sld [smem:[#allocation2 + $0x1]]
        %v274 = vld [vmem:[%s232] sm:$0xff]
        %v275 = vld [vmem:[%s241] sm:$0xff]
        %v276 = vld [vmem:[#allocation6] sm:$0xff]
        %v277 = vstv %s272
        %v278 = vmul.f32 %v277, %v274
        %vm279 = vcmask 64512
        %v281 = vsel %vm279, %v276, 0
        %283 = vmatprep.subr.mxu0 0.0
        %284 = vmatpush1.msra.mxu0 %v274
        %285 = vmatprep.subr.mxu0 0.0
        %286 = vmatpush1.msra.mxu0 0.0
        %287 = vmatprep.subr.mxu0 0.0
        %288 = vmatpush1.msra.mxu0 0.0
        %289 = vmatprep.subr.mxu0 0.0
        %290 = vmatpush1.msra.mxu0 0.0
        %291 = vmatprep.subr.mxu0 0.0
        %292 = vmatpush1.msra.mxu0 0.0
        %293 = vmatprep.subr.mxu0 0.0
        %294 = vmatpush1.msra.mxu0 0.0
        %295 = vmatprep.subr.mxu0 0.0
        %296 = vmatpush1.msra.mxu0 0.0
        %297 = vmatprep.subr.mxu0 0.0
        %298 = vmatpush1.msra.mxu0 0.0
        %299 = vmatprep.subr.mxu0 0.0
        %300 = vmatpush1.msra.mxu0 0.0
        %301 = vmatprep.subr.mxu0 0.0
        %302 = vmatpush1.msra.mxu0 0.0
        %303 = vmatprep.subr.mxu0 0.0
        %304 = vmatpush1.msra.mxu0 0.0
        %305 = vmatprep.subr.mxu0 0.0
        %306 = vmatpush1.msra.mxu0 0.0
        %307 = vmatprep.subr.mxu0 0.0
        %308 = vmatpush1.msra.mxu0 0.0
        %309 = vmatprep.subr.mxu0 0.0
        %310 = vmatpush1.msra.mxu0 0.0
        %311 = vmatprep.subr.mxu0 0.0
        %312 = vmatpush1.msra.mxu0 0.0
        %313 = vmatprep.subr.mxu0 0.0
        %314 = vmatpush1.msra.mxu0 0.0
        %315 = vmatprep.subr.mxu0 0.0
        %316 = vmatpush1.msra.mxu0 0.0
        %317 = vmatprep.subr.mxu0 0.0
        %318 = vmatpush1.msra.mxu0 0.0
        %319 = vmatprep.subr.mxu0 0.0
        %320 = vmatpush1.msra.mxu0 0.0
        %321 = vmatprep.subr.mxu0 0.0
        %322 = vmatpush1.msra.mxu0 0.0
        %323 = vmatprep.subr.mxu0 0.0
        %324 = vmatpush1.msra.mxu0 0.0
        %325 = vmatprep.subr.mxu0 0.0
        %326 = vmatpush1.msra.mxu0 0.0
        %327 = vmatprep.subr.mxu0 0.0
        %328 = vmatpush1.msra.mxu0 0.0
        %329 = vmatprep.subr.mxu0 0.0
        %330 = vmatpush1.msra.mxu0 0.0
        %331 = vmatprep.subr.mxu0 0.0
        %332 = vmatpush1.msra.mxu0 0.0
        %333 = vmatprep.subr.mxu0 0.0
        %334 = vmatpush1.msra.mxu0 0.0
        %335 = vmatprep.subr.mxu0 0.0
        %336 = vmatpush1.msra.mxu0 0.0
        %337 = vmatprep.subr.mxu0 0.0
        %338 = vmatpush1.msra.mxu0 0.0
        %339 = vmatprep.subr.mxu0 0.0
        %340 = vmatpush1.msra.mxu0 0.0
        %341 = vmatprep.subr.mxu0 0.0
        %342 = vmatpush1.msra.mxu0 0.0
        %343 = vmatprep.subr.mxu0 0.0
        %344 = vmatpush1.msra.mxu0 0.0
        %345 = vmatprep.subr.mxu0 0.0
        %346 = vmatpush1.msra.mxu0 0.0
        %347 = vmatprep.mubr.f32.mxu0 0.0
        %348 = vmatmul.mubr.f32.gmra.mrb[0].mxu0 %v281
        %v349 = vpop.f32.mrb[0].mxu0
        %v350 = vadd.f32 %v278, %v349
        %v351 = vpop.f32.mrb[0].mxu0
        %352 = vdwg.mxu0
        %v353 = vstv %s273
        %v354 = vmul.f32 %v353, %v275
        %v355 = vadd.f32 %v350, %v354
        %356 = vst [vmem:[%s271] sm:$0xff] %v355
        %s357 = sand.u32 %s125, 1
        %s358 = scalar_lea.sflag [#allocation4], %s357
        %s359 = sand.u32 %s125, 1
        %s360 = smul.addr %s359, 8
        %s361 = scalar_lea.vmem [#allocation10], %s360
        // Predicated region
        $region53: #{tpu_custom_call.1} parent=35 // pred_check
          %p362 = pneg %p135
        $region54: #{tpu_custom_call.1} parent=35 // pred_check_branch
          %364 = sbr.rel (%p362) target = $region56
        $region55: #{tpu_custom_call.1} parent=35 // pred_region
          %s366 = ssub.s32 128, 128
          %367 = vsyncadd %s358, %s366
          %s368 = smul.addr %s23, 128
          %s369 = scalar_lea.hbm %s4, %s368
          %s371 = sshll.u32 %s361, 4
          %s372 = int_to_ptr.vmem [resolvable:$true] %s371
          %374 = dma.vmem_to_hbm [thread:$0]  %s372, 128, %s369, %s358
        $region56: #{tpu_custom_call.1} parent=35 // pred_fallthru
          _
      $region36: #{tpu_custom_call.1} parent=5 // pred_fallthru
        _
      %p375 = scmp.le.s32.totalorder 2, %s18
      // Predicated region
      $region57: #{tpu_custom_call.1} parent=5 // pred_check
        %p376 = pneg %p375
      $region58: #{tpu_custom_call.1} parent=5 // pred_check_branch
        %378 = sbr.rel (%p376) target = $region60
      $region59: #{tpu_custom_call.1} parent=5 // pred_region
        %s379 = ssub.s32 %s18, 2
        // Predicated region
        $region61: #{tpu_custom_call.1} parent=59 // pred_check
          %p380 = pneg %p141
        $region62: #{tpu_custom_call.1} parent=59 // pred_check_branch
          %382 = sbr.rel (%p380) target = $region64
        $region63: #{tpu_custom_call.1} parent=59 // pred_region
          %s383 = sand.u32 %s126, 1
          %s384 = scalar_lea.sflag [#allocation4], %s383
          %s385 = sand.u32 %s126, 1
          %s386 = smul.addr %s385, 8
          %s387 = scalar_lea.vmem [#allocation10], %s386
          %388 = dma.done %s384, 128
        $region64: #{tpu_custom_call.1} parent=59 // pred_fallthru
          _
      $region60: #{tpu_custom_call.1} parent=5 // pred_fallthru
        _
    $region6: #{tpu_custom_call.1} parent=1 // loop_footer
      %s22 = sadd.s32 1, %s18
    $region7: #{tpu_custom_call.1} parent=1 // loop_footer_branch
      %17 = sbr.rel target = $region3
    $region8: #{tpu_custom_call.1} parent=1 // loop_exit
      _
    %389 = vsyncpa [#allocation3], 1
    %s390 = scalar_lea.sflag [#allocation3], 1
    %391 = vsyncpa %s390, 1
    %392 = vsyncpa [#allocation8], 1
    %s393 = scalar_lea.sflag [#allocation8], 1
    %394 = vsyncpa %s393, 1
    %395 = vsyncpa [#allocation4], 1
    %s396 = scalar_lea.sflag [#allocation4], 1
    %397 = vsyncpa %s396, 1
    %398 = vsyncpa [#allocation5], 1
    %s399 = scalar_lea.sflag [#allocation5], 1
    %400 = vsyncpa %s399, 1

</llo_original>
